<compile_context>
chip_gen: v5e
topology: v5e:2x2
jax: 0.10.0
libtpu: 0.0.40
codegen_flags: <defaults>
</compile_context>

<pallas_src>
import math

import jax
import jax.numpy as jnp
from jax.experimental import pallas as pl
from jax.experimental.pallas import tpu as pltpu


def _round_up(x, m):
    return (x + m - 1) // m * m


def mlp_kernel(x_ref, w1_ref, b1_ref, w2_ref, b2_ref, w3_ref, b3_ref,
               w4_ref, b4_ref, o_ref):
    # x/weights are bf16 VMEM tiles; biases are fp32 (1, F) row vectors that
    # broadcast in the dot epilogue.  All accumulation is fp32 on the MXU.
    x = x_ref[...]                                                    # (TB, 1024) bf16

    h1 = jnp.dot(x, w1_ref[...], preferred_element_type=jnp.float32) + b1_ref[...]
    h1 = jnp.maximum(h1, 0.0).astype(jnp.bfloat16)                    # ReLU (Dropout = id)

    h2 = jnp.dot(h1, w2_ref[...], preferred_element_type=jnp.float32) + b2_ref[...]
    h2 = jnp.maximum(h2, 0.0).astype(jnp.bfloat16)

    h3 = jnp.dot(h2, w3_ref[...], preferred_element_type=jnp.float32) + b3_ref[...]
    h3 = jnp.maximum(h3, 0.0).astype(jnp.bfloat16)

    h4 = jnp.dot(h3, w4_ref[...], preferred_element_type=jnp.float32) + b4_ref[...]

    o_ref[...] = h4.astype(o_ref.dtype)


def mlp_forward(x_nchw, params, *, tb=256):
    """x_nchw: (N, C, H, W) float32. Returns (N, 2) float32."""
    n = x_nchw.shape[0]
    d_in = math.prod(x_nchw.shape[1:])
    x2d = x_nchw.reshape(n, d_in)                                     # == nn.Flatten()

    # Batch tile: MXU-friendly default; shrink (sublane-aligned) for tiny batches.
    tb = max(8, min(tb, _round_up(n, 8)))
    n_pad = _round_up(n, tb)
    if n_pad != n:
        x2d = jnp.pad(x2d, ((0, n_pad - n), (0, 0)))

    # bf16 activations/weights, fp32 biases + accumulation.
    x2d = x2d.astype(jnp.bfloat16)
    w1, b1, w2, b2, w3, b3, w4, b4 = params
    w1, w2, w3, w4 = (w.astype(jnp.bfloat16) for w in (w1, w2, w3, w4))
    b1, b2, b3, b4 = (b.astype(jnp.float32) for b in (b1, b2, b3, b4))

    resident = lambda arr: pl.BlockSpec(arr.shape, lambda i: (0, 0))  # stays in VMEM

    out = pl.pallas_call(
        mlp_kernel,
        out_shape=jax.ShapeDtypeStruct((n_pad, 2), jnp.float32),
        grid=(n_pad // tb,),
        in_specs=[
            pl.BlockSpec((tb, d_in), lambda i: (i, 0)),               # X: tiled + pipelined
            resident(w1), resident(b1),
            resident(w2), resident(b2),
            resident(w3), resident(b3),
            resident(w4), resident(b4),
        ],
        out_specs=pl.BlockSpec((tb, 2), lambda i: (i, 0)),
        compiler_params=pltpu.CompilerParams(
            dimension_semantics=("parallel",),                        # v7x: 2 TCs
        ),
    )(x2d, w1, b1, w2, b2, w3, b3, w4, b4)

    return out[:n]


def init_params(key, in_features):
    """Deterministic init mimicking torch.nn.Linear defaults (uniform +/- 1/sqrt(fan_in))."""
    dims = [(in_features, 256), (256, 64), (64, 32), (32, 2)]
    params = []
    for i, (fan_in, fan_out) in enumerate(dims):
        kw, kb = jax.random.split(jax.random.fold_in(key, i))
        bound = 1.0 / (fan_in ** 0.5)
        w = jax.random.uniform(kw, (fan_in, fan_out), jnp.float32, -bound, bound)
        b = jax.random.uniform(kb, (1, fan_out), jnp.float32, -bound, bound)
        params += [w, b]
    return tuple(params)


if __name__ == "__main__":
    key = jax.random.PRNGKey(0)
    kx, kp = jax.random.split(key)

    # Small NCHW input consistent with the module: in_features = 4*16*16 = 1024
    x = jax.random.normal(kx, (2, 4, 16, 16), dtype=jnp.float32)
    params = init_params(kp, in_features=4 * 16 * 16)

    y = mlp_forward(x, params)
    jax.block_until_ready(y)
    assert y.shape == (2, 2)

    # Reference with the same bf16 input/weight quantization but plain-JAX fp32 math.
    w1, b1, w2, b2, w3, b3, w4, b4 = params
    xr = x.reshape(2, -1).astype(jnp.bfloat16).astype(jnp.float32)
    wf = [w.astype(jnp.bfloat16).astype(jnp.float32) for w in (w1, w2, w3, w4)]
    ref = jnp.maximum(xr @ wf[0] + b1, 0.0)
    ref = jnp.maximum(ref @ wf[1] + b2, 0.0)
    ref = jnp.maximum(ref @ wf[2] + b3, 0.0)
    ref = ref @ wf[3] + b4
    assert jnp.allclose(y, ref, atol=1e-2, rtol=1e-2), (y, ref)

    print("KERNEL_OK")
</pallas_src>

<mosaic_0001>
module attributes {stable_mosaic.version = 11 : i64} {
  func.func @mlp_kernel(%arg0: i32, %arg1: memref<8x1024xbf16, #tpu.memory_space<vmem>>, %arg2: memref<1024x256xbf16, #tpu.memory_space<vmem>>, %arg3: memref<1x256xf32, #tpu.memory_space<vmem>>, %arg4: memref<256x64xbf16, #tpu.memory_space<vmem>>, %arg5: memref<1x64xf32, #tpu.memory_space<vmem>>, %arg6: memref<64x32xbf16, #tpu.memory_space<vmem>>, %arg7: memref<1x32xf32, #tpu.memory_space<vmem>>, %arg8: memref<32x2xbf16, #tpu.memory_space<vmem>>, %arg9: memref<1x2xf32, #tpu.memory_space<vmem>>, %arg10: memref<8x2xf32, #tpu.memory_space<vmem>>) attributes {dimension_semantics = [#tpu.dimension_semantics<parallel>], iteration_bounds = array<i64: 1>, scalar_prefetch = 0 : i64, scratch_operands = 0 : i64, tpu.core_type = #tpu.core_type<tc>, window_params = [{transform_indices = @transform_0, window_bounds = array<i64: 8, 1024>}, {pipeline_mode = #tpu.pipeline_mode<synchronous>, transform_indices = @transform_1, window_bounds = array<i64: 1024, 256>}, {pipeline_mode = #tpu.pipeline_mode<synchronous>, transform_indices = @transform_2, window_bounds = array<i64: 1, 256>}, {pipeline_mode = #tpu.pipeline_mode<synchronous>, transform_indices = @transform_3, window_bounds = array<i64: 256, 64>}, {pipeline_mode = #tpu.pipeline_mode<synchronous>, transform_indices = @transform_4, window_bounds = array<i64: 1, 64>}, {pipeline_mode = #tpu.pipeline_mode<synchronous>, transform_indices = @transform_5, window_bounds = array<i64: 64, 32>}, {pipeline_mode = #tpu.pipeline_mode<synchronous>, transform_indices = @transform_6, window_bounds = array<i64: 1, 32>}, {pipeline_mode = #tpu.pipeline_mode<synchronous>, transform_indices = @transform_7, window_bounds = array<i64: 32, 2>}, {pipeline_mode = #tpu.pipeline_mode<synchronous>, transform_indices = @transform_8, window_bounds = array<i64: 1, 2>}, {transform_indices = @transform_9, window_bounds = array<i64: 8, 2>}]} {
    %c0 = arith.constant 0 : index
    %c0_0 = arith.constant 0 : index
    %0 = vector.load %arg1[%c0, %c0_0] : memref<8x1024xbf16, #tpu.memory_space<vmem>>, vector<8x1024xbf16>
    %c0_1 = arith.constant 0 : index
    %c0_2 = arith.constant 0 : index
    %1 = vector.load %arg2[%c0_1, %c0_2] : memref<1024x256xbf16, #tpu.memory_space<vmem>>, vector<1024x256xbf16>
    %cst = arith.constant dense<0.000000e+00> : vector<8x256xf32>
    %2 = tpu.matmul %0, %1, %cst {dimension_numbers = #tpu.dot_dimension_numbers<[1], [0], [0], [1], [0, 0, 1, 1], [], []>} : vector<8x1024xbf16>, vector<1024x256xbf16>, vector<8x256xf32> -> vector<8x256xf32>
    %c0_3 = arith.constant 0 : index
    %c0_4 = arith.constant 0 : index
    %3 = vector.load %arg3[%c0_3, %c0_4] : memref<1x256xf32, #tpu.memory_space<vmem>>, vector<1x256xf32>
    %4 = vector.broadcast %3 : vector<1x256xf32> to vector<8x256xf32>
    %5 = arith.addf %2, %4 : vector<8x256xf32>
    %cst_5 = arith.constant 0.000000e+00 : f32
    %6 = vector.broadcast %cst_5 : f32 to vector<8x256xf32>
    %7 = arith.maximumf %5, %6 : vector<8x256xf32>
    %8 = arith.truncf %7 : vector<8x256xf32> to vector<8x256xbf16>
    %c0_6 = arith.constant 0 : index
    %c0_7 = arith.constant 0 : index
    %9 = vector.load %arg4[%c0_6, %c0_7] : memref<256x64xbf16, #tpu.memory_space<vmem>>, vector<256x64xbf16>
    %cst_8 = arith.constant dense<0.000000e+00> : vector<8x64xf32>
    %10 = tpu.matmul %8, %9, %cst_8 {dimension_numbers = #tpu.dot_dimension_numbers<[1], [0], [0], [1], [0, 0, 1, 1], [], []>} : vector<8x256xbf16>, vector<256x64xbf16>, vector<8x64xf32> -> vector<8x64xf32>
    %c0_9 = arith.constant 0 : index
    %c0_10 = arith.constant 0 : index
    %11 = vector.load %arg5[%c0_9, %c0_10] : memref<1x64xf32, #tpu.memory_space<vmem>>, vector<1x64xf32>
    %12 = vector.broadcast %11 : vector<1x64xf32> to vector<8x64xf32>
    %13 = arith.addf %10, %12 : vector<8x64xf32>
    %cst_11 = arith.constant 0.000000e+00 : f32
    %14 = vector.broadcast %cst_11 : f32 to vector<8x64xf32>
    %15 = arith.maximumf %13, %14 : vector<8x64xf32>
    %16 = arith.truncf %15 : vector<8x64xf32> to vector<8x64xbf16>
    %c0_12 = arith.constant 0 : index
    %c0_13 = arith.constant 0 : index
    %17 = vector.load %arg6[%c0_12, %c0_13] : memref<64x32xbf16, #tpu.memory_space<vmem>>, vector<64x32xbf16>
    %cst_14 = arith.constant dense<0.000000e+00> : vector<8x32xf32>
    %18 = tpu.matmul %16, %17, %cst_14 {dimension_numbers = #tpu.dot_dimension_numbers<[1], [0], [0], [1], [0, 0, 1, 1], [], []>} : vector<8x64xbf16>, vector<64x32xbf16>, vector<8x32xf32> -> vector<8x32xf32>
    %c0_15 = arith.constant 0 : index
    %c0_16 = arith.constant 0 : index
    %19 = vector.load %arg7[%c0_15, %c0_16] : memref<1x32xf32, #tpu.memory_space<vmem>>, vector<1x32xf32>
    %20 = vector.broadcast %19 : vector<1x32xf32> to vector<8x32xf32>
    %21 = arith.addf %18, %20 : vector<8x32xf32>
    %cst_17 = arith.constant 0.000000e+00 : f32
    %22 = vector.broadcast %cst_17 : f32 to vector<8x32xf32>
    %23 = arith.maximumf %21, %22 : vector<8x32xf32>
    %24 = arith.truncf %23 : vector<8x32xf32> to vector<8x32xbf16>
    %c0_18 = arith.constant 0 : index
    %c0_19 = arith.constant 0 : index
    %25 = vector.load %arg8[%c0_18, %c0_19] : memref<32x2xbf16, #tpu.memory_space<vmem>>, vector<32x2xbf16>
    %cst_20 = arith.constant dense<0.000000e+00> : vector<8x2xf32>
    %26 = tpu.matmul %24, %25, %cst_20 {dimension_numbers = #tpu.dot_dimension_numbers<[1], [0], [0], [1], [0, 0, 1, 1], [], []>} : vector<8x32xbf16>, vector<32x2xbf16>, vector<8x2xf32> -> vector<8x2xf32>
    %c0_21 = arith.constant 0 : index
    %c0_22 = arith.constant 0 : index
    %27 = vector.load %arg9[%c0_21, %c0_22] : memref<1x2xf32, #tpu.memory_space<vmem>>, vector<1x2xf32>
    %28 = vector.broadcast %27 : vector<1x2xf32> to vector<8x2xf32>
    %29 = arith.addf %26, %28 : vector<8x2xf32>
    %c0_23 = arith.constant 0 : index
    %c0_24 = arith.constant 0 : index
    %30 = vector.load %arg10[%c0_23, %c0_24] : memref<8x2xf32, #tpu.memory_space<vmem>>, vector<8x2xf32>
    tpu.vector_store %arg10[%c0_23, %c0_24], %29 {strides = array<i32>} : memref<8x2xf32, #tpu.memory_space<vmem>>, vector<8x2xf32>,
    return
  }
  func.func @transform_0(%arg0: i32) -> (i32, i32) {
    %c0_i32 = arith.constant 0 : i32
    %c0_i32_0 = arith.constant 0 : i32
    return %arg0, %c0_i32 : i32, i32
  }
  func.func @transform_1(%arg0: i32) -> (i32, i32) {
    %c0_i32 = arith.constant 0 : i32
    %c0_i32_0 = arith.constant 0 : i32
    %c0_i32_1 = arith.constant 0 : i32
    return %c0_i32, %c0_i32_0 : i32, i32
  }
  func.func @transform_2(%arg0: i32) -> (i32, i32) {
    %c0_i32 = arith.constant 0 : i32
    %c0_i32_0 = arith.constant 0 : i32
    %c0_i32_1 = arith.constant 0 : i32
    return %c0_i32, %c0_i32_0 : i32, i32
  }
  func.func @transform_3(%arg0: i32) -> (i32, i32) {
    %c0_i32 = arith.constant 0 : i32
    %c0_i32_0 = arith.constant 0 : i32
    %c0_i32_1 = arith.constant 0 : i32
    return %c0_i32, %c0_i32_0 : i32, i32
  }
  func.func @transform_4(%arg0: i32) -> (i32, i32) {
    %c0_i32 = arith.constant 0 : i32
    %c0_i32_0 = arith.constant 0 : i32
    %c0_i32_1 = arith.constant 0 : i32
    return %c0_i32, %c0_i32_0 : i32, i32
  }
  func.func @transform_5(%arg0: i32) -> (i32, i32) {
    %c0_i32 = arith.constant 0 : i32
    %c0_i32_0 = arith.constant 0 : i32
    %c0_i32_1 = arith.constant 0 : i32
    return %c0_i32, %c0_i32_0 : i32, i32
  }
  func.func @transform_6(%arg0: i32) -> (i32, i32) {
    %c0_i32 = arith.constant 0 : i32
    %c0_i32_0 = arith.constant 0 : i32
    %c0_i32_1 = arith.constant 0 : i32
    return %c0_i32, %c0_i32_0 : i32, i32
  }
  func.func @transform_7(%arg0: i32) -> (i32, i32) {
    %c0_i32 = arith.constant 0 : i32
    %c0_i32_0 = arith.constant 0 : i32
    %c0_i32_1 = arith.constant 0 : i32
    return %c0_i32, %c0_i32_0 : i32, i32
  }
  func.func @transform_8(%arg0: i32) -> (i32, i32) {
    %c0_i32 = arith.constant 0 : i32
    %c0_i32_0 = arith.constant 0 : i32
    %c0_i32_1 = arith.constant 0 : i32
    return %c0_i32, %c0_i32_0 : i32, i32
  }
  func.func @transform_9(%arg0: i32) -> (i32, i32) {
    %c0_i32 = arith.constant 0 : i32
    %c0_i32_0 = arith.constant 0 : i32
    return %arg0, %c0_i32 : i32, i32
  }
}

</mosaic_0001>

<llo_original>
// kernel: tpu_custom_call.1
$region0: #{tpu_custom_call.1}
  #allocation0 [shape = 'u32[]', space=smem, size = 0x4, offset = 0x4, fixed_abs, tag = 'smem constant byte address 0x4 - core index']
  #allocation1 [shape = 'u32[72,128]{1,0:T(1,128)}', space=vmem, size = 0x9000, scoped, tag = 'internal scratch']
  %s0 = inlined_call_operand.vmem [shape: bf16[8,1024], index: 0, kind: input, shape index: {}]
  %s1 = inlined_call_operand.hbm [shape: bf16[1024,256], index: 1, kind: input, shape index: {}]
  %s2 = inlined_call_operand.vmem [shape: f32[1,256], index: 2, kind: input, shape index: {}]
  %s3 = inlined_call_operand.vmem [shape: bf16[256,64], index: 3, kind: input, shape index: {}]
  %s4 = inlined_call_operand.vmem [shape: f32[1,64], index: 4, kind: input, shape index: {}]
  %s5 = inlined_call_operand.vmem [shape: bf16[64,32], index: 5, kind: input, shape index: {}]
  %s6 = inlined_call_operand.vmem [shape: f32[1,32], index: 6, kind: input, shape index: {}]
  %s7 = inlined_call_operand.vmem [shape: bf16[32,2], index: 7, kind: input, shape index: {}]
  %s8 = inlined_call_operand.vmem [shape: f32[1,2], index: 8, kind: input, shape index: {}]
  %s9 = inlined_call_operand.vmem [shape: f32[8,2], index: 9, kind: output, shape index: {}]
  %s10 = sld [smem:[#allocation0]]
  $region50: #{tpu_custom_call.1} parent=0
    _
  %s12 = ssub.s32 1, %s10
  %s13 = scalar_select 0, %s12, %s10
  $region1: #{tpu_custom_call.1} parent=0
    #allocation2 [shape = 'u8[524288]{0}', space=vmem, size = 0x80000, scoped, tag = 'input window, operand 1, single buffered']
    #allocation3 [shape = 's32[1]{0}', space=sflag, size = 0x4, scoped, tag = 'scoped memory for tpu_custom_call.1']
    %14 = vsyncpa [#allocation3], 0
    // Predicated region
    $region2: #{tpu_custom_call.1} parent=1 // pred_check
      _
    $region3: #{tpu_custom_call.1} parent=1 // pred_check_branch
      %16 = sbr.rel (0) target = $region5
    $region4: #{tpu_custom_call.1} parent=1 // pred_region
      _
    $region5: #{tpu_custom_call.1} parent=1 // pred_fallthru
      _
    // Predicated region
    $region6: #{tpu_custom_call.1} parent=1 // pred_check
      _
    $region7: #{tpu_custom_call.1} parent=1 // pred_check_branch
      %18 = sbr.rel (0) target = $region9
    $region8: #{tpu_custom_call.1} parent=1 // pred_region
      %20 = vsyncadd [#allocation3], 0
      %s21 = sshll.u32 %s1, 4
      %s22 = int_to_ptr.hbm [resolvable:$true] %s21
      %s23 = sshll.u32 [#allocation2], 4
      %s24 = int_to_ptr.vmem [resolvable:$true] %s23
      %29 = dma.hbm_to_vmem [thread:$0]  %s22, 16384, %s24, [#allocation3], 128, 128, 8
    $region9: #{tpu_custom_call.1} parent=1 // pred_fallthru
      _
    // Predicated region
    $region10: #{tpu_custom_call.1} parent=1 // pred_check
      _
    $region11: #{tpu_custom_call.1} parent=1 // pred_check_branch
      %31 = sbr.rel (0) target = $region13
    $region12: #{tpu_custom_call.1} parent=1 // pred_region
      _
    $region13: #{tpu_custom_call.1} parent=1 // pred_fallthru
      _
    // Predicated region
    $region14: #{tpu_custom_call.1} parent=1 // pred_check
      _
    $region15: #{tpu_custom_call.1} parent=1 // pred_check_branch
      %33 = sbr.rel (0) target = $region17
    $region16: #{tpu_custom_call.1} parent=1 // pred_region
      _
    $region17: #{tpu_custom_call.1} parent=1 // pred_fallthru
      _
    // Predicated region
    $region18: #{tpu_custom_call.1} parent=1 // pred_check
      _
    $region19: #{tpu_custom_call.1} parent=1 // pred_check_branch
      %35 = sbr.rel (0) target = $region21
    $region20: #{tpu_custom_call.1} parent=1 // pred_region
      _
    $region21: #{tpu_custom_call.1} parent=1 // pred_fallthru
      _
    // Predicated region
    $region22: #{tpu_custom_call.1} parent=1 // pred_check
      _
    $region23: #{tpu_custom_call.1} parent=1 // pred_check_branch
      %37 = sbr.rel (0) target = $region25
    $region24: #{tpu_custom_call.1} parent=1 // pred_region
      _
    $region25: #{tpu_custom_call.1} parent=1 // pred_fallthru
      _
    // Predicated region
    $region26: #{tpu_custom_call.1} parent=1 // pred_check
      _
    $region27: #{tpu_custom_call.1} parent=1 // pred_check_branch
      %39 = sbr.rel (0) target = $region29
    $region28: #{tpu_custom_call.1} parent=1 // pred_region
      _
    $region29: #{tpu_custom_call.1} parent=1 // pred_fallthru
      _
    // Predicated region
    $region30: #{tpu_custom_call.1} parent=1 // pred_check
      _
    $region31: #{tpu_custom_call.1} parent=1 // pred_check_branch
      %41 = sbr.rel (0) target = $region33
    $region32: #{tpu_custom_call.1} parent=1 // pred_region
      _
    $region33: #{tpu_custom_call.1} parent=1 // pred_fallthru
      _
    // Predicated region
    $region34: #{tpu_custom_call.1} parent=1 // pred_check
      _
    $region35: #{tpu_custom_call.1} parent=1 // pred_check_branch
      %43 = sbr.rel (0) target = $region37
    $region36: #{tpu_custom_call.1} parent=1 // pred_region
      _
    $region37: #{tpu_custom_call.1} parent=1 // pred_fallthru
      _
    // Predicated region
    $region38: #{tpu_custom_call.1} parent=1 // pred_check
      _
    $region39: #{tpu_custom_call.1} parent=1 // pred_check_branch
      %45 = sbr.rel (0) target = $region41
    $region40: #{tpu_custom_call.1} parent=1 // pred_region
      %47 = dma.done [#allocation3], 16384
    $region41: #{tpu_custom_call.1} parent=1 // pred_fallthru
      _
    %v49 = vld [vmem:[%s0] sm:$0xff]
    %v50 = vld [vmem:[%s0 + $0x8] sm:$0xff]
    %v51 = vld [vmem:[%s0 + $0x10] sm:$0xff]
    %v52 = vld [vmem:[%s0 + $0x18] sm:$0xff]
    %v53 = vld [vmem:[#allocation2] sm:$0xff]
    %v54 = vld [vmem:[#allocation2 + $0x8] sm:$0xff]
    %v55 = vld [vmem:[#allocation2 + $0x10] sm:$0xff]
    %v56 = vld [vmem:[#allocation2 + $0x18] sm:$0xff]
    %v57 = vld [vmem:[#allocation2 + $0x20] sm:$0xff]
    %v58 = vld [vmem:[#allocation2 + $0x28] sm:$0xff]
    %v59 = vld [vmem:[#allocation2 + $0x30] sm:$0xff]
    %v60 = vld [vmem:[#allocation2 + $0x38] sm:$0xff]
    %v61 = vld [vmem:[#allocation2 + $0x40] sm:$0xff]
    %v62 = vld [vmem:[#allocation2 + $0x48] sm:$0xff]
    %v63 = vld [vmem:[#allocation2 + $0x50] sm:$0xff]
    %v64 = vld [vmem:[#allocation2 + $0x58] sm:$0xff]
    %v65 = vld [vmem:[#allocation2 + $0x60] sm:$0xff]
    %v66 = vld [vmem:[#allocation2 + $0x68] sm:$0xff]
    %v67 = vld [vmem:[#allocation2 + $0x70] sm:$0xff]
    %v68 = vld [vmem:[#allocation2 + $0x78] sm:$0xff]
    %v69 = vld [vmem:[#allocation2 + $0x80] sm:$0xff]
    %v70 = vld [vmem:[#allocation2 + $0x88] sm:$0xff]
    %v71 = vld [vmem:[#allocation2 + $0x90] sm:$0xff]
    %v72 = vld [vmem:[#allocation2 + $0x98] sm:$0xff]
    %v73 = vld [vmem:[#allocation2 + $0xa0] sm:$0xff]
    %v74 = vld [vmem:[#allocation2 + $0xa8] sm:$0xff]
    %v75 = vld [vmem:[#allocation2 + $0xb0] sm:$0xff]
    %v76 = vld [vmem:[#allocation2 + $0xb8] sm:$0xff]
    %v77 = vld [vmem:[#allocation2 + $0xc0] sm:$0xff]
    %v78 = vld [vmem:[#allocation2 + $0xc8] sm:$0xff]
    %v79 = vld [vmem:[#allocation2 + $0xd0] sm:$0xff]
    %v80 = vld [vmem:[#allocation2 + $0xd8] sm:$0xff]
    %v81 = vld [vmem:[#allocation2 + $0xe0] sm:$0xff]
    %v82 = vld [vmem:[#allocation2 + $0xe8] sm:$0xff]
    %v83 = vld [vmem:[#allocation2 + $0xf0] sm:$0xff]
    %v84 = vld [vmem:[#allocation2 + $0xf8] sm:$0xff]
    %v85 = vld [vmem:[#allocation2 + $0x100] sm:$0xff]
    %v86 = vld [vmem:[#allocation2 + $0x108] sm:$0xff]
    %v87 = vld [vmem:[#allocation2 + $0x110] sm:$0xff]
    %v88 = vld [vmem:[#allocation2 + $0x118] sm:$0xff]
    %v89 = vld [vmem:[#allocation2 + $0x120] sm:$0xff]
    %v90 = vld [vmem:[#allocation2 + $0x128] sm:$0xff]
    %v91 = vld [vmem:[#allocation2 + $0x130] sm:$0xff]
    %v92 = vld [vmem:[#allocation2 + $0x138] sm:$0xff]
    %v93 = vld [vmem:[#allocation2 + $0x140] sm:$0xff]
    %v94 = vld [vmem:[#allocation2 + $0x148] sm:$0xff]
    %v95 = vld [vmem:[#allocation2 + $0x150] sm:$0xff]
    %v96 = vld [vmem:[#allocation2 + $0x158] sm:$0xff]
    %v97 = vld [vmem:[#allocation2 + $0x160] sm:$0xff]
    %v98 = vld [vmem:[#allocation2 + $0x168] sm:$0xff]
    %v99 = vld [vmem:[#allocation2 + $0x170] sm:$0xff]
    %v100 = vld [vmem:[#allocation2 + $0x178] sm:$0xff]
    %v101 = vld [vmem:[#allocation2 + $0x180] sm:$0xff]
    %v102 = vld [vmem:[#allocation2 + $0x188] sm:$0xff]
    %v103 = vld [vmem:[#allocation2 + $0x190] sm:$0xff]
    %v104 = vld [vmem:[#allocation2 + $0x198] sm:$0xff]
    %v105 = vld [vmem:[#allocation2 + $0x1a0] sm:$0xff]
    %v106 = vld [vmem:[#allocation2 + $0x1a8] sm:$0xff]
    %v107 = vld [vmem:[#allocation2 + $0x1b0] sm:$0xff]
    %v108 = vld [vmem:[#allocation2 + $0x1b8] sm:$0xff]
    %v109 = vld [vmem:[#allocation2 + $0x1c0] sm:$0xff]
    %v110 = vld [vmem:[#allocation2 + $0x1c8] sm:$0xff]
    %v111 = vld [vmem:[#allocation2 + $0x1d0] sm:$0xff]
    %v112 = vld [vmem:[#allocation2 + $0x1d8] sm:$0xff]
    %v113 = vld [vmem:[#allocation2 + $0x1e0] sm:$0xff]
    %v114 = vld [vmem:[#allocation2 + $0x1e8] sm:$0xff]
    %v115 = vld [vmem:[#allocation2 + $0x1f0] sm:$0xff]
    %v116 = vld [vmem:[#allocation2 + $0x1f8] sm:$0xff]
    %v117 = vld [vmem:[#allocation2 + $0x200] sm:$0xff]
    %v118 = vld [vmem:[#allocation2 + $0x208] sm:$0xff]
    %v119 = vld [vmem:[#allocation2 + $0x210] sm:$0xff]
    %v120 = vld [vmem:[#allocation2 + $0x218] sm:$0xff]
    %v121 = vld [vmem:[#allocation2 + $0x220] sm:$0xff]
    %v122 = vld [vmem:[#allocation2 + $0x228] sm:$0xff]
    %v123 = vld [vmem:[#allocation2 + $0x230] sm:$0xff]
    %v124 = vld [vmem:[#allocation2 + $0x238] sm:$0xff]
    %v125 = vld [vmem:[#allocation2 + $0x240] sm:$0xff]
    %v126 = vld [vmem:[#allocation2 + $0x248] sm:$0xff]
    %v127 = vld [vmem:[#allocation2 + $0x250] sm:$0xff]
    %v128 = vld [vmem:[#allocation2 + $0x258] sm:$0xff]
    %v129 = vld [vmem:[#allocation2 + $0x260] sm:$0xff]
    %v130 = vld [vmem:[#allocation2 + $0x268] sm:$0xff]
    %v131 = vld [vmem:[#allocation2 + $0x270] sm:$0xff]
    %v132 = vld [vmem:[#allocation2 + $0x278] sm:$0xff]
    %v133 = vld [vmem:[#allocation2 + $0x280] sm:$0xff]
    %v134 = vld [vmem:[#allocation2 + $0x288] sm:$0xff]
    %v135 = vld [vmem:[#allocation2 + $0x290] sm:$0xff]
    %v136 = vld [vmem:[#allocation2 + $0x298] sm:$0xff]
    %v137 = vld [vmem:[#allocation2 + $0x2a0] sm:$0xff]
    %v138 = vld [vmem:[#allocation2 + $0x2a8] sm:$0xff]
    %v139 = vld [vmem:[#allocation2 + $0x2b0] sm:$0xff]
    %v140 = vld [vmem:[#allocation2 + $0x2b8] sm:$0xff]
    %v141 = vld [vmem:[#allocation2 + $0x2c0] sm:$0xff]
    %v142 = vld [vmem:[#allocation2 + $0x2c8] sm:$0xff]
    %v143 = vld [vmem:[#allocation2 + $0x2d0] sm:$0xff]
    %v144 = vld [vmem:[#allocation2 + $0x2d8] sm:$0xff]
    %v145 = vld [vmem:[#allocation2 + $0x2e0] sm:$0xff]
    %v146 = vld [vmem:[#allocation2 + $0x2e8] sm:$0xff]
    %v147 = vld [vmem:[#allocation2 + $0x2f0] sm:$0xff]
    %v148 = vld [vmem:[#allocation2 + $0x2f8] sm:$0xff]
    %v149 = vld [vmem:[#allocation2 + $0x300] sm:$0xff]
    %v150 = vld [vmem:[#allocation2 + $0x308] sm:$0xff]
    %v151 = vld [vmem:[#allocation2 + $0x310] sm:$0xff]
    %v152 = vld [vmem:[#allocation2 + $0x318] sm:$0xff]
    %v153 = vld [vmem:[#allocation2 + $0x320] sm:$0xff]
    %v154 = vld [vmem:[#allocation2 + $0x328] sm:$0xff]
    %v155 = vld [vmem:[#allocation2 + $0x330] sm:$0xff]
    %v156 = vld [vmem:[#allocation2 + $0x338] sm:$0xff]
    %v157 = vld [vmem:[#allocation2 + $0x340] sm:$0xff]
    %v158 = vld [vmem:[#allocation2 + $0x348] sm:$0xff]
    %v159 = vld [vmem:[#allocation2 + $0x350] sm:$0xff]
    %v160 = vld [vmem:[#allocation2 + $0x358] sm:$0xff]
    %v161 = vld [vmem:[#allocation2 + $0x360] sm:$0xff]
    %v162 = vld [vmem:[#allocation2 + $0x368] sm:$0xff]
    %v163 = vld [vmem:[#allocation2 + $0x370] sm:$0xff]
    %v164 = vld [vmem:[#allocation2 + $0x378] sm:$0xff]
    %v165 = vld [vmem:[#allocation2 + $0x380] sm:$0xff]
    %v166 = vld [vmem:[#allocation2 + $0x388] sm:$0xff]
    %v167 = vld [vmem:[#allocation2 + $0x390] sm:$0xff]
    %v168 = vld [vmem:[#allocation2 + $0x398] sm:$0xff]
    %v169 = vld [vmem:[#allocation2 + $0x3a0] sm:$0xff]
    %v170 = vld [vmem:[#allocation2 + $0x3a8] sm:$0xff]
    %v171 = vld [vmem:[#allocation2 + $0x3b0] sm:$0xff]
    %v172 = vld [vmem:[#allocation2 + $0x3b8] sm:$0xff]
    %v173 = vld [vmem:[#allocation2 + $0x3c0] sm:$0xff]
    %v174 = vld [vmem:[#allocation2 + $0x3c8] sm:$0xff]
    %v175 = vld [vmem:[#allocation2 + $0x3d0] sm:$0xff]
    %v176 = vld [vmem:[#allocation2 + $0x3d8] sm:$0xff]
    %v177 = vld [vmem:[#allocation2 + $0x3e0] sm:$0xff]
    %v178 = vld [vmem:[#allocation2 + $0x3e8] sm:$0xff]
    %v179 = vld [vmem:[#allocation2 + $0x3f0] sm:$0xff]
    %v180 = vld [vmem:[#allocation2 + $0x3f8] sm:$0xff]
    %v181 = vld [vmem:[%s2] sm:$0x3]
    %v183 = vperm.slane %v181, 0
    %v184 = vperm.slane %v181, 1
    %v191 = vunpack.c.l.b16 %v49
    %v192 = vunpack.c.h.b16 %v49
    %v193 = vunpack.c.l.b16 %v50
    %v194 = vunpack.c.h.b16 %v50
    %v195 = vunpack.c.l.b16 %v51
    %v196 = vunpack.c.h.b16 %v51
    %v197 = vunpack.c.l.b16 %v52
    %v198 = vunpack.c.h.b16 %v52
    %v199 = vpack.c.b16 %v191, %v191
    %v200 = vpack.c.b16 %v192, %v192
    %v201 = vpack.c.b16 %v193, %v193
    %v202 = vpack.c.b16 %v194, %v194
    %v203 = vpack.c.b16 %v195, %v195
    %v204 = vpack.c.b16 %v196, %v196
    %v205 = vpack.c.b16 %v197, %v197
    %v206 = vpack.c.b16 %v198, %v198
    %v343 = vunpack.c.l.b16 %v53
    %v344 = vunpack.c.h.b16 %v53
    %v345 = vunpack.c.l.b16 %v54
    %v346 = vunpack.c.h.b16 %v54
    %v347 = vunpack.c.l.b16 %v55
    %v348 = vunpack.c.h.b16 %v55
    %v349 = vunpack.c.l.b16 %v56
    %v350 = vunpack.c.h.b16 %v56
    %v351 = vunpack.c.l.b16 %v57
    %v352 = vunpack.c.h.b16 %v57
    %v353 = vunpack.c.l.b16 %v58
    %v354 = vunpack.c.h.b16 %v58
    %v355 = vunpack.c.l.b16 %v59
    %v356 = vunpack.c.h.b16 %v59
    %v357 = vunpack.c.l.b16 %v60
    %v358 = vunpack.c.h.b16 %v60
    %v359 = vunpack.c.l.b16 %v61
    %v360 = vunpack.c.h.b16 %v61
    %v361 = vunpack.c.l.b16 %v62
    %v362 = vunpack.c.h.b16 %v62
    %v363 = vunpack.c.l.b16 %v63
    %v364 = vunpack.c.h.b16 %v63
    %v365 = vunpack.c.l.b16 %v64
    %v366 = vunpack.c.h.b16 %v64
    %v367 = vunpack.c.l.b16 %v65
    %v368 = vunpack.c.h.b16 %v65
    %v369 = vunpack.c.l.b16 %v66
    %v370 = vunpack.c.h.b16 %v66
    %v371 = vunpack.c.l.b16 %v67
    %v372 = vunpack.c.h.b16 %v67
    %v373 = vunpack.c.l.b16 %v68
    %v374 = vunpack.c.h.b16 %v68
    %v375 = vunpack.c.l.b16 %v69
    %v376 = vunpack.c.h.b16 %v69
    %v377 = vunpack.c.l.b16 %v70
    %v378 = vunpack.c.h.b16 %v70
    %v379 = vunpack.c.l.b16 %v71
    %v380 = vunpack.c.h.b16 %v71
    %v381 = vunpack.c.l.b16 %v72
    %v382 = vunpack.c.h.b16 %v72
    %v383 = vunpack.c.l.b16 %v73
    %v384 = vunpack.c.h.b16 %v73
    %v385 = vunpack.c.l.b16 %v74
    %v386 = vunpack.c.h.b16 %v74
    %v387 = vunpack.c.l.b16 %v75
    %v388 = vunpack.c.h.b16 %v75
    %v389 = vunpack.c.l.b16 %v76
    %v390 = vunpack.c.h.b16 %v76
    %v391 = vunpack.c.l.b16 %v77
    %v392 = vunpack.c.h.b16 %v77
    %v393 = vunpack.c.l.b16 %v78
    %v394 = vunpack.c.h.b16 %v78
    %v395 = vunpack.c.l.b16 %v79
    %v396 = vunpack.c.h.b16 %v79
    %v397 = vunpack.c.l.b16 %v80
    %v398 = vunpack.c.h.b16 %v80
    %v399 = vunpack.c.l.b16 %v81
    %v400 = vunpack.c.h.b16 %v81
    %v401 = vunpack.c.l.b16 %v82
    %v402 = vunpack.c.h.b16 %v82
    %v403 = vunpack.c.l.b16 %v83
    %v404 = vunpack.c.h.b16 %v83
    %v405 = vunpack.c.l.b16 %v84
    %v406 = vunpack.c.h.b16 %v84
    %v407 = vunpack.c.l.b16 %v85
    %v408 = vunpack.c.h.b16 %v85
    %v409 = vunpack.c.l.b16 %v86
    %v410 = vunpack.c.h.b16 %v86
    %v411 = vunpack.c.l.b16 %v87
    %v412 = vunpack.c.h.b16 %v87
    %v413 = vunpack.c.l.b16 %v88
    %v414 = vunpack.c.h.b16 %v88
    %v415 = vunpack.c.l.b16 %v89
    %v416 = vunpack.c.h.b16 %v89
    %v417 = vunpack.c.l.b16 %v90
    %v418 = vunpack.c.h.b16 %v90
    %v419 = vunpack.c.l.b16 %v91
    %v420 = vunpack.c.h.b16 %v91
    %v421 = vunpack.c.l.b16 %v92
    %v422 = vunpack.c.h.b16 %v92
    %v423 = vunpack.c.l.b16 %v93
    %v424 = vunpack.c.h.b16 %v93
    %v425 = vunpack.c.l.b16 %v94
    %v426 = vunpack.c.h.b16 %v94
    %v427 = vunpack.c.l.b16 %v95
    %v428 = vunpack.c.h.b16 %v95
    %v429 = vunpack.c.l.b16 %v96
    %v430 = vunpack.c.h.b16 %v96
    %v431 = vunpack.c.l.b16 %v97
    %v432 = vunpack.c.h.b16 %v97
    %v433 = vunpack.c.l.b16 %v98
    %v434 = vunpack.c.h.b16 %v98
    %v435 = vunpack.c.l.b16 %v99
    %v436 = vunpack.c.h.b16 %v99
    %v437 = vunpack.c.l.b16 %v100
    %v438 = vunpack.c.h.b16 %v100
    %v439 = vunpack.c.l.b16 %v101
    %v440 = vunpack.c.h.b16 %v101
    %v441 = vunpack.c.l.b16 %v102
    %v442 = vunpack.c.h.b16 %v102
    %v443 = vunpack.c.l.b16 %v103
    %v444 = vunpack.c.h.b16 %v103
    %v445 = vunpack.c.l.b16 %v104
    %v446 = vunpack.c.h.b16 %v104
    %v447 = vunpack.c.l.b16 %v105
    %v448 = vunpack.c.h.b16 %v105
    %v449 = vunpack.c.l.b16 %v106
    %v450 = vunpack.c.h.b16 %v106
    %v451 = vunpack.c.l.b16 %v107
    %v452 = vunpack.c.h.b16 %v107
    %v453 = vunpack.c.l.b16 %v108
    %v454 = vunpack.c.h.b16 %v108
    %v455 = vunpack.c.l.b16 %v109
    %v456 = vunpack.c.h.b16 %v109
    %v457 = vunpack.c.l.b16 %v110
    %v458 = vunpack.c.h.b16 %v110
    %v459 = vunpack.c.l.b16 %v111
    %v460 = vunpack.c.h.b16 %v111
    %v461 = vunpack.c.l.b16 %v112
    %v462 = vunpack.c.h.b16 %v112
    %v463 = vunpack.c.l.b16 %v113
    %v464 = vunpack.c.h.b16 %v113
    %v465 = vunpack.c.l.b16 %v114
    %v466 = vunpack.c.h.b16 %v114
    %v467 = vunpack.c.l.b16 %v115
    %v468 = vunpack.c.h.b16 %v115
    %v469 = vunpack.c.l.b16 %v116
    %v470 = vunpack.c.h.b16 %v116
    %v471 = vunpack.c.l.b16 %v117
    %v472 = vunpack.c.h.b16 %v117
    %v473 = vunpack.c.l.b16 %v118
    %v474 = vunpack.c.h.b16 %v118
    %v475 = vunpack.c.l.b16 %v119
    %v476 = vunpack.c.h.b16 %v119
    %v477 = vunpack.c.l.b16 %v120
    %v478 = vunpack.c.h.b16 %v120
    %v479 = vunpack.c.l.b16 %v121
    %v480 = vunpack.c.h.b16 %v121
    %v481 = vunpack.c.l.b16 %v122
    %v482 = vunpack.c.h.b16 %v122
    %v483 = vunpack.c.l.b16 %v123
    %v484 = vunpack.c.h.b16 %v123
    %v485 = vunpack.c.l.b16 %v124
    %v486 = vunpack.c.h.b16 %v124
    %v487 = vunpack.c.l.b16 %v125
    %v488 = vunpack.c.h.b16 %v125
    %v489 = vunpack.c.l.b16 %v126
    %v490 = vunpack.c.h.b16 %v126
    %v491 = vunpack.c.l.b16 %v127
    %v492 = vunpack.c.h.b16 %v127
    %v493 = vunpack.c.l.b16 %v128
    %v494 = vunpack.c.h.b16 %v128
    %v495 = vunpack.c.l.b16 %v129
    %v496 = vunpack.c.h.b16 %v129
    %v497 = vunpack.c.l.b16 %v130
    %v498 = vunpack.c.h.b16 %v130
    %v499 = vunpack.c.l.b16 %v131
    %v500 = vunpack.c.h.b16 %v131
    %v501 = vunpack.c.l.b16 %v132
    %v502 = vunpack.c.h.b16 %v132
    %v503 = vunpack.c.l.b16 %v133
    %v504 = vunpack.c.h.b16 %v133
    %v505 = vunpack.c.l.b16 %v134
    %v506 = vunpack.c.h.b16 %v134
    %v507 = vunpack.c.l.b16 %v135
    %v508 = vunpack.c.h.b16 %v135
    %v509 = vunpack.c.l.b16 %v136
    %v510 = vunpack.c.h.b16 %v136
    %v511 = vunpack.c.l.b16 %v137
    %v512 = vunpack.c.h.b16 %v137
    %v513 = vunpack.c.l.b16 %v138
    %v514 = vunpack.c.h.b16 %v138
    %v515 = vunpack.c.l.b16 %v139
    %v516 = vunpack.c.h.b16 %v139
    %v517 = vunpack.c.l.b16 %v140
    %v518 = vunpack.c.h.b16 %v140
    %v519 = vunpack.c.l.b16 %v141
    %v520 = vunpack.c.h.b16 %v141
    %v521 = vunpack.c.l.b16 %v142
    %v522 = vunpack.c.h.b16 %v142
    %v523 = vunpack.c.l.b16 %v143
    %v524 = vunpack.c.h.b16 %v143
    %v525 = vunpack.c.l.b16 %v144
    %v526 = vunpack.c.h.b16 %v144
    %v527 = vunpack.c.l.b16 %v145
    %v528 = vunpack.c.h.b16 %v145
    %v529 = vunpack.c.l.b16 %v146
    %v530 = vunpack.c.h.b16 %v146
    %v531 = vunpack.c.l.b16 %v147
    %v532 = vunpack.c.h.b16 %v147
    %v533 = vunpack.c.l.b16 %v148
    %v534 = vunpack.c.h.b16 %v148
    %v535 = vunpack.c.l.b16 %v149
    %v536 = vunpack.c.h.b16 %v149
    %v537 = vunpack.c.l.b16 %v150
    %v538 = vunpack.c.h.b16 %v150
    %v539 = vunpack.c.l.b16 %v151
    %v540 = vunpack.c.h.b16 %v151
    %v541 = vunpack.c.l.b16 %v152
    %v542 = vunpack.c.h.b16 %v152
    %v543 = vunpack.c.l.b16 %v153
    %v544 = vunpack.c.h.b16 %v153
    %v545 = vunpack.c.l.b16 %v154
    %v546 = vunpack.c.h.b16 %v154
    %v547 = vunpack.c.l.b16 %v155
    %v548 = vunpack.c.h.b16 %v155
    %v549 = vunpack.c.l.b16 %v156
    %v550 = vunpack.c.h.b16 %v156
    %v551 = vunpack.c.l.b16 %v157
    %v552 = vunpack.c.h.b16 %v157
    %v553 = vunpack.c.l.b16 %v158
    %v554 = vunpack.c.h.b16 %v158
    %v555 = vunpack.c.l.b16 %v159
    %v556 = vunpack.c.h.b16 %v159
    %v557 = vunpack.c.l.b16 %v160
    %v558 = vunpack.c.h.b16 %v160
    %v559 = vunpack.c.l.b16 %v161
    %v560 = vunpack.c.h.b16 %v161
    %v561 = vunpack.c.l.b16 %v162
    %v562 = vunpack.c.h.b16 %v162
    %v563 = vunpack.c.l.b16 %v163
    %v564 = vunpack.c.h.b16 %v163
    %v565 = vunpack.c.l.b16 %v164
    %v566 = vunpack.c.h.b16 %v164
    %v567 = vunpack.c.l.b16 %v165
    %v568 = vunpack.c.h.b16 %v165
    %v569 = vunpack.c.l.b16 %v166
    %v570 = vunpack.c.h.b16 %v166
    %v571 = vunpack.c.l.b16 %v167
    %v572 = vunpack.c.h.b16 %v167
    %v573 = vunpack.c.l.b16 %v168
    %v574 = vunpack.c.h.b16 %v168
    %v575 = vunpack.c.l.b16 %v169
    %v576 = vunpack.c.h.b16 %v169
    %v577 = vunpack.c.l.b16 %v170
    %v578 = vunpack.c.h.b16 %v170
    %v579 = vunpack.c.l.b16 %v171
    %v580 = vunpack.c.h.b16 %v171
    %v581 = vunpack.c.l.b16 %v172
    %v582 = vunpack.c.h.b16 %v172
    %v583 = vunpack.c.l.b16 %v173
    %v584 = vunpack.c.h.b16 %v173
    %v585 = vunpack.c.l.b16 %v174
    %v586 = vunpack.c.h.b16 %v174
    %v587 = vunpack.c.l.b16 %v175
    %v588 = vunpack.c.h.b16 %v175
    %v589 = vunpack.c.l.b16 %v176
    %v590 = vunpack.c.h.b16 %v176
    %v591 = vunpack.c.l.b16 %v177
    %v592 = vunpack.c.h.b16 %v177
    %v593 = vunpack.c.l.b16 %v178
    %v594 = vunpack.c.h.b16 %v178
    %v595 = vunpack.c.l.b16 %v179
    %v596 = vunpack.c.h.b16 %v179
    %v597 = vunpack.c.l.b16 %v180
    %v598 = vunpack.c.h.b16 %v180
    %v599 = vpack.c.b16 %v345, %v343
    %v600 = vpack.c.b16 %v346, %v344
    %v601 = vpack.c.b16 %v349, %v347
    %v602 = vpack.c.b16 %v350, %v348
    %v603 = vpack.c.b16 %v353, %v351
    %v604 = vpack.c.b16 %v354, %v352
    %v605 = vpack.c.b16 %v357, %v355
    %v606 = vpack.c.b16 %v358, %v356
    %v607 = vpack.c.b16 %v361, %v359
    %v608 = vpack.c.b16 %v362, %v360
    %v609 = vpack.c.b16 %v365, %v363
    %v610 = vpack.c.b16 %v366, %v364
    %v611 = vpack.c.b16 %v369, %v367
    %v612 = vpack.c.b16 %v370, %v368
    %v613 = vpack.c.b16 %v373, %v371
    %v614 = vpack.c.b16 %v374, %v372
    %v615 = vpack.c.b16 %v377, %v375
    %v616 = vpack.c.b16 %v378, %v376
    %v617 = vpack.c.b16 %v381, %v379
    %v618 = vpack.c.b16 %v382, %v380
    %v619 = vpack.c.b16 %v385, %v383
    %v620 = vpack.c.b16 %v386, %v384
    %v621 = vpack.c.b16 %v389, %v387
    %v622 = vpack.c.b16 %v390, %v388
    %v623 = vpack.c.b16 %v393, %v391
    %v624 = vpack.c.b16 %v394, %v392
    %v625 = vpack.c.b16 %v397, %v395
    %v626 = vpack.c.b16 %v398, %v396
    %v627 = vpack.c.b16 %v401, %v399
    %v628 = vpack.c.b16 %v402, %v400
    %v629 = vpack.c.b16 %v405, %v403
    %v630 = vpack.c.b16 %v406, %v404
    %v631 = vpack.c.b16 %v409, %v407
    %v632 = vpack.c.b16 %v410, %v408
    %v633 = vpack.c.b16 %v413, %v411
    %v634 = vpack.c.b16 %v414, %v412
    %v635 = vpack.c.b16 %v417, %v415
    %v636 = vpack.c.b16 %v418, %v416
    %v637 = vpack.c.b16 %v421, %v419
    %v638 = vpack.c.b16 %v422, %v420
    %v639 = vpack.c.b16 %v425, %v423
    %v640 = vpack.c.b16 %v426, %v424
    %v641 = vpack.c.b16 %v429, %v427
    %v642 = vpack.c.b16 %v430, %v428
    %v643 = vpack.c.b16 %v433, %v431
    %v644 = vpack.c.b16 %v434, %v432
    %v645 = vpack.c.b16 %v437, %v435
    %v646 = vpack.c.b16 %v438, %v436
    %v647 = vpack.c.b16 %v441, %v439
    %v648 = vpack.c.b16 %v442, %v440
    %v649 = vpack.c.b16 %v445, %v443
    %v650 = vpack.c.b16 %v446, %v444
    %v651 = vpack.c.b16 %v449, %v447
    %v652 = vpack.c.b16 %v450, %v448
    %v653 = vpack.c.b16 %v453, %v451
    %v654 = vpack.c.b16 %v454, %v452
    %v655 = vpack.c.b16 %v457, %v455
    %v656 = vpack.c.b16 %v458, %v456
    %v657 = vpack.c.b16 %v461, %v459
    %v658 = vpack.c.b16 %v462, %v460
    %v659 = vpack.c.b16 %v465, %v463
    %v660 = vpack.c.b16 %v466, %v464
    %v661 = vpack.c.b16 %v469, %v467
    %v662 = vpack.c.b16 %v470, %v468
    %v663 = vpack.c.b16 %v473, %v471
    %v664 = vpack.c.b16 %v474, %v472
    %v665 = vpack.c.b16 %v477, %v475
    %v666 = vpack.c.b16 %v478, %v476
    %v667 = vpack.c.b16 %v481, %v479
    %v668 = vpack.c.b16 %v482, %v480
    %v669 = vpack.c.b16 %v485, %v483
    %v670 = vpack.c.b16 %v486, %v484
    %v671 = vpack.c.b16 %v489, %v487
    %v672 = vpack.c.b16 %v490, %v488
    %v673 = vpack.c.b16 %v493, %v491
    %v674 = vpack.c.b16 %v494, %v492
    %v675 = vpack.c.b16 %v497, %v495
    %v676 = vpack.c.b16 %v498, %v496
    %v677 = vpack.c.b16 %v501, %v499
    %v678 = vpack.c.b16 %v502, %v500
    %v679 = vpack.c.b16 %v505, %v503
    %v680 = vpack.c.b16 %v506, %v504
    %v681 = vpack.c.b16 %v509, %v507
    %v682 = vpack.c.b16 %v510, %v508
    %v683 = vpack.c.b16 %v513, %v511
    %v684 = vpack.c.b16 %v514, %v512
    %v685 = vpack.c.b16 %v517, %v515
    %v686 = vpack.c.b16 %v518, %v516
    %v687 = vpack.c.b16 %v521, %v519
    %v688 = vpack.c.b16 %v522, %v520
    %v689 = vpack.c.b16 %v525, %v523
    %v690 = vpack.c.b16 %v526, %v524
    %v691 = vpack.c.b16 %v529, %v527
    %v692 = vpack.c.b16 %v530, %v528
    %v693 = vpack.c.b16 %v533, %v531
    %v694 = vpack.c.b16 %v534, %v532
    %v695 = vpack.c.b16 %v537, %v535
    %v696 = vpack.c.b16 %v538, %v536
    %v697 = vpack.c.b16 %v541, %v539
    %v698 = vpack.c.b16 %v542, %v540
    %v699 = vpack.c.b16 %v545, %v543
    %v700 = vpack.c.b16 %v546, %v544
    %v701 = vpack.c.b16 %v549, %v547
    %v702 = vpack.c.b16 %v550, %v548
    %v703 = vpack.c.b16 %v553, %v551
    %v704 = vpack.c.b16 %v554, %v552
    %v705 = vpack.c.b16 %v557, %v555
    %v706 = vpack.c.b16 %v558, %v556
    %v707 = vpack.c.b16 %v561, %v559
    %v708 = vpack.c.b16 %v562, %v560
    %v709 = vpack.c.b16 %v565, %v563
    %v710 = vpack.c.b16 %v566, %v564
    %v711 = vpack.c.b16 %v569, %v567
    %v712 = vpack.c.b16 %v570, %v568
    %v713 = vpack.c.b16 %v573, %v571
    %v714 = vpack.c.b16 %v574, %v572
    %v715 = vpack.c.b16 %v577, %v575
    %v716 = vpack.c.b16 %v578, %v576
    %v717 = vpack.c.b16 %v581, %v579
    %v718 = vpack.c.b16 %v582, %v580
    %v719 = vpack.c.b16 %v585, %v583
    %v720 = vpack.c.b16 %v586, %v584
    %v721 = vpack.c.b16 %v589, %v587
    %v722 = vpack.c.b16 %v590, %v588
    %v723 = vpack.c.b16 %v593, %v591
    %v724 = vpack.c.b16 %v594, %v592
    %v725 = vpack.c.b16 %v597, %v595
    %v726 = vpack.c.b16 %v598, %v596
    %855 = vmatpush.bf16.msra.mxu0 %v613
    %856 = vmatpush.bf16.msra.mxu0 %v611
    %857 = vmatpush.bf16.msra.mxu0 %v609
    %858 = vmatpush.bf16.msra.mxu0 %v607
    %859 = vmatpush.bf16.msra.mxu0 %v605
    %860 = vmatpush.bf16.msra.mxu0 %v603
    %861 = vmatpush.bf16.msra.mxu0 %v601
    %862 = vmatpush.bf16.msra.mxu0 %v599
    %863 = vmatmul.bf16.gmra.mxu0 %v199
    %v864 = vpop.f32.mrf.mxu0
    %v865 = vadd.f32 %v183, %v864
    %v866 = vpop.f32.mrf.mxu0
    %867 = vdwg.mxu0
    %868 = vmatpush.bf16.msra.mxu0 %v629
    %869 = vmatpush.bf16.msra.mxu0 %v627
    %870 = vmatpush.bf16.msra.mxu0 %v625
    %871 = vmatpush.bf16.msra.mxu0 %v623
    %872 = vmatpush.bf16.msra.mxu0 %v621
    %873 = vmatpush.bf16.msra.mxu0 %v619
    %874 = vmatpush.bf16.msra.mxu0 %v617
    %875 = vmatpush.bf16.msra.mxu0 %v615
    %876 = vmatmul.bf16.gmra.mxu0 %v200
    %v877 = vpop.f32.mrf.mxu0
    %v878 = vadd.f32 %v865, %v877
    %v879 = vpop.f32.mrf.mxu0
    %880 = vdwg.mxu0
    %881 = vmatpush.bf16.msra.mxu0 %v645
    %882 = vmatpush.bf16.msra.mxu0 %v643
    %883 = vmatpush.bf16.msra.mxu0 %v641
    %884 = vmatpush.bf16.msra.mxu0 %v639
    %885 = vmatpush.bf16.msra.mxu0 %v637
    %886 = vmatpush.bf16.msra.mxu0 %v635
    %887 = vmatpush.bf16.msra.mxu0 %v633
    %888 = vmatpush.bf16.msra.mxu0 %v631
    %889 = vmatmul.bf16.gmra.mxu0 %v201
    %v890 = vpop.f32.mrf.mxu0
    %v891 = vadd.f32 %v878, %v890
    %v892 = vpop.f32.mrf.mxu0
    %893 = vdwg.mxu0
    %894 = vmatpush.bf16.msra.mxu0 %v661
    %895 = vmatpush.bf16.msra.mxu0 %v659
    %896 = vmatpush.bf16.msra.mxu0 %v657
    %897 = vmatpush.bf16.msra.mxu0 %v655
    %898 = vmatpush.bf16.msra.mxu0 %v653
    %899 = vmatpush.bf16.msra.mxu0 %v651
    %900 = vmatpush.bf16.msra.mxu0 %v649
    %901 = vmatpush.bf16.msra.mxu0 %v647
    %902 = vmatmul.bf16.gmra.mxu0 %v202
    %v903 = vpop.f32.mrf.mxu0
    %v904 = vadd.f32 %v891, %v903
    %v905 = vpop.f32.mrf.mxu0
    %906 = vdwg.mxu0
    %907 = vmatpush.bf16.msra.mxu0 %v677
    %908 = vmatpush.bf16.msra.mxu0 %v675
    %909 = vmatpush.bf16.msra.mxu0 %v673
    %910 = vmatpush.bf16.msra.mxu0 %v671
    %911 = vmatpush.bf16.msra.mxu0 %v669
    %912 = vmatpush.bf16.msra.mxu0 %v667
    %913 = vmatpush.bf16.msra.mxu0 %v665
    %914 = vmatpush.bf16.msra.mxu0 %v663
    %915 = vmatmul.bf16.gmra.mxu0 %v203
    %v916 = vpop.f32.mrf.mxu0
    %v917 = vadd.f32 %v904, %v916
    %v918 = vpop.f32.mrf.mxu0
    %919 = vdwg.mxu0
    %920 = vmatpush.bf16.msra.mxu0 %v693
    %921 = vmatpush.bf16.msra.mxu0 %v691
    %922 = vmatpush.bf16.msra.mxu0 %v689
    %923 = vmatpush.bf16.msra.mxu0 %v687
    %924 = vmatpush.bf16.msra.mxu0 %v685
    %925 = vmatpush.bf16.msra.mxu0 %v683
    %926 = vmatpush.bf16.msra.mxu0 %v681
    %927 = vmatpush.bf16.msra.mxu0 %v679
    %928 = vmatmul.bf16.gmra.mxu0 %v204
    %v929 = vpop.f32.mrf.mxu0
    %v930 = vadd.f32 %v917, %v929
    %v931 = vpop.f32.mrf.mxu0
    %932 = vdwg.mxu0
    %933 = vmatpush.bf16.msra.mxu0 %v709
    %934 = vmatpush.bf16.msra.mxu0 %v707
    %935 = vmatpush.bf16.msra.mxu0 %v705
    %936 = vmatpush.bf16.msra.mxu0 %v703
    %937 = vmatpush.bf16.msra.mxu0 %v701
    %938 = vmatpush.bf16.msra.mxu0 %v699
    %939 = vmatpush.bf16.msra.mxu0 %v697
    %940 = vmatpush.bf16.msra.mxu0 %v695
    %941 = vmatmul.bf16.gmra.mxu0 %v205
    %v942 = vpop.f32.mrf.mxu0
    %v943 = vadd.f32 %v930, %v942
    %v944 = vpop.f32.mrf.mxu0
    %945 = vdwg.mxu0
    %946 = vmatpush.bf16.msra.mxu0 %v725
    %947 = vmatpush.bf16.msra.mxu0 %v723
    %948 = vmatpush.bf16.msra.mxu0 %v721
    %949 = vmatpush.bf16.msra.mxu0 %v719
    %950 = vmatpush.bf16.msra.mxu0 %v717
    %951 = vmatpush.bf16.msra.mxu0 %v715
    %952 = vmatpush.bf16.msra.mxu0 %v713
    %953 = vmatpush.bf16.msra.mxu0 %v711
    %954 = vmatmul.bf16.gmra.mxu0 %v206
    %v955 = vpop.f32.mrf.mxu0
    %v956 = vadd.f32 %v943, %v955
    %v957 = vpop.f32.mrf.mxu0
    %958 = vdwg.mxu0
    %959 = vmatpush.bf16.msra.mxu0 %v614
    %960 = vmatpush.bf16.msra.mxu0 %v612
    %961 = vmatpush.bf16.msra.mxu0 %v610
    %962 = vmatpush.bf16.msra.mxu0 %v608
    %963 = vmatpush.bf16.msra.mxu0 %v606
    %964 = vmatpush.bf16.msra.mxu0 %v604
    %965 = vmatpush.bf16.msra.mxu0 %v602
    %966 = vmatpush.bf16.msra.mxu0 %v600
    %967 = vmatmul.bf16.gmra.mxu0 %v199
    %v968 = vpop.f32.mrf.mxu0
    %v969 = vadd.f32 %v184, %v968
    %v970 = vpop.f32.mrf.mxu0
    %971 = vdwg.mxu0
    %972 = vmatpush.bf16.msra.mxu0 %v630
    %973 = vmatpush.bf16.msra.mxu0 %v628
    %974 = vmatpush.bf16.msra.mxu0 %v626
    %975 = vmatpush.bf16.msra.mxu0 %v624
    %976 = vmatpush.bf16.msra.mxu0 %v622
    %977 = vmatpush.bf16.msra.mxu0 %v620
    %978 = vmatpush.bf16.msra.mxu0 %v618
    %979 = vmatpush.bf16.msra.mxu0 %v616
    %980 = vmatmul.bf16.gmra.mxu0 %v200
    %v981 = vpop.f32.mrf.mxu0
    %v982 = vadd.f32 %v969, %v981
    %v983 = vpop.f32.mrf.mxu0
    %984 = vdwg.mxu0
    %985 = vmatpush.bf16.msra.mxu0 %v646
    %986 = vmatpush.bf16.msra.mxu0 %v644
    %987 = vmatpush.bf16.msra.mxu0 %v642
    %988 = vmatpush.bf16.msra.mxu0 %v640
    %989 = vmatpush.bf16.msra.mxu0 %v638
    %990 = vmatpush.bf16.msra.mxu0 %v636
    %991 = vmatpush.bf16.msra.mxu0 %v634
    %992 = vmatpush.bf16.msra.mxu0 %v632
    %993 = vmatmul.bf16.gmra.mxu0 %v201
    %v994 = vpop.f32.mrf.mxu0
    %v995 = vadd.f32 %v982, %v994
    %v996 = vpop.f32.mrf.mxu0
    %997 = vdwg.mxu0
    %998 = vmatpush.bf16.msra.mxu0 %v662
    %999 = vmatpush.bf16.msra.mxu0 %v660
    %1000 = vmatpush.bf16.msra.mxu0 %v658
    %1001 = vmatpush.bf16.msra.mxu0 %v656
    %1002 = vmatpush.bf16.msra.mxu0 %v654
    %1003 = vmatpush.bf16.msra.mxu0 %v652
    %1004 = vmatpush.bf16.msra.mxu0 %v650
    %1005 = vmatpush.bf16.msra.mxu0 %v648
    %1006 = vmatmul.bf16.gmra.mxu0 %v202
    %v1007 = vpop.f32.mrf.mxu0
    %v1008 = vadd.f32 %v995, %v1007
    %v1009 = vpop.f32.mrf.mxu0
    %1010 = vdwg.mxu0
    %1011 = vmatpush.bf16.msra.mxu0 %v678
    %1012 = vmatpush.bf16.msra.mxu0 %v676
    %1013 = vmatpush.bf16.msra.mxu0 %v674
    %1014 = vmatpush.bf16.msra.mxu0 %v672
    %1015 = vmatpush.bf16.msra.mxu0 %v670
    %1016 = vmatpush.bf16.msra.mxu0 %v668
    %1017 = vmatpush.bf16.msra.mxu0 %v666
    %1018 = vmatpush.bf16.msra.mxu0 %v664
    %1019 = vmatmul.bf16.gmra.mxu0 %v203
    %v1020 = vpop.f32.mrf.mxu0
    %v1021 = vadd.f32 %v1008, %v1020
    %v1022 = vpop.f32.mrf.mxu0
    %1023 = vdwg.mxu0
    %1024 = vmatpush.bf16.msra.mxu0 %v694
    %1025 = vmatpush.bf16.msra.mxu0 %v692
    %1026 = vmatpush.bf16.msra.mxu0 %v690
    %1027 = vmatpush.bf16.msra.mxu0 %v688
    %1028 = vmatpush.bf16.msra.mxu0 %v686
    %1029 = vmatpush.bf16.msra.mxu0 %v684
    %1030 = vmatpush.bf16.msra.mxu0 %v682
    %1031 = vmatpush.bf16.msra.mxu0 %v680
    %1032 = vmatmul.bf16.gmra.mxu0 %v204
    %v1033 = vpop.f32.mrf.mxu0
    %v1034 = vadd.f32 %v1021, %v1033
    %v1035 = vpop.f32.mrf.mxu0
    %1036 = vdwg.mxu0
    %1037 = vmatpush.bf16.msra.mxu0 %v710
    %1038 = vmatpush.bf16.msra.mxu0 %v708
    %1039 = vmatpush.bf16.msra.mxu0 %v706
    %1040 = vmatpush.bf16.msra.mxu0 %v704
    %1041 = vmatpush.bf16.msra.mxu0 %v702
    %1042 = vmatpush.bf16.msra.mxu0 %v700
    %1043 = vmatpush.bf16.msra.mxu0 %v698
    %1044 = vmatpush.bf16.msra.mxu0 %v696
    %1045 = vmatmul.bf16.gmra.mxu0 %v205
    %v1046 = vpop.f32.mrf.mxu0
    %v1047 = vadd.f32 %v1034, %v1046
    %v1048 = vpop.f32.mrf.mxu0
    %1049 = vdwg.mxu0
    %1050 = vmatpush.bf16.msra.mxu0 %v726
    %1051 = vmatpush.bf16.msra.mxu0 %v724
    %1052 = vmatpush.bf16.msra.mxu0 %v722
    %1053 = vmatpush.bf16.msra.mxu0 %v720
    %1054 = vmatpush.bf16.msra.mxu0 %v718
    %1055 = vmatpush.bf16.msra.mxu0 %v716
    %1056 = vmatpush.bf16.msra.mxu0 %v714
    %1057 = vmatpush.bf16.msra.mxu0 %v712
    %1058 = vmatmul.bf16.gmra.mxu0 %v206
    %v1059 = vpop.f32.mrf.mxu0
    %v1060 = vadd.f32 %v1047, %v1059
    %v1061 = vpop.f32.mrf.mxu0
    %1062 = vdwg.mxu0
    %v1063 = vmax.f32 %v956, 0.0
    %v1064 = vmax.f32 %v1060, 0.0
    %v1065 = vpack.c.bf16 %v1063, %v1063
    %v1066 = vpack.c.bf16 %v1064, %v1064
    %v1067 = vld [vmem:[%s3] sm:$0xf]
    %v1068 = vld [vmem:[%s3 + $0x4] sm:$0xf]
    %v1069 = vld [vmem:[%s3 + $0x8] sm:$0xf]
    %v1070 = vld [vmem:[%s3 + $0xc] sm:$0xf]
    %v1071 = vld [vmem:[%s3 + $0x10] sm:$0xf]
    %v1072 = vld [vmem:[%s3 + $0x14] sm:$0xf]
    %v1073 = vld [vmem:[%s3 + $0x18] sm:$0xf]
    %v1074 = vld [vmem:[%s3 + $0x1c] sm:$0xf]
    %v1075 = vld [vmem:[%s3 + $0x20] sm:$0xf]
    %v1076 = vld [vmem:[%s3 + $0x24] sm:$0xf]
    %v1077 = vld [vmem:[%s3 + $0x28] sm:$0xf]
    %v1078 = vld [vmem:[%s3 + $0x2c] sm:$0xf]
    %v1079 = vld [vmem:[%s3 + $0x30] sm:$0xf]
    %v1080 = vld [vmem:[%s3 + $0x34] sm:$0xf]
    %v1081 = vld [vmem:[%s3 + $0x38] sm:$0xf]
    %v1082 = vld [vmem:[%s3 + $0x3c] sm:$0xf]
    %v1083 = vld [vmem:[%s3 + $0x40] sm:$0xf]
    %v1084 = vld [vmem:[%s3 + $0x44] sm:$0xf]
    %v1085 = vld [vmem:[%s3 + $0x48] sm:$0xf]
    %v1086 = vld [vmem:[%s3 + $0x4c] sm:$0xf]
    %v1087 = vld [vmem:[%s3 + $0x50] sm:$0xf]
    %v1088 = vld [vmem:[%s3 + $0x54] sm:$0xf]
    %v1089 = vld [vmem:[%s3 + $0x58] sm:$0xf]
    %v1090 = vld [vmem:[%s3 + $0x5c] sm:$0xf]
    %v1091 = vld [vmem:[%s3 + $0x60] sm:$0xf]
    %v1092 = vld [vmem:[%s3 + $0x64] sm:$0xf]
    %v1093 = vld [vmem:[%s3 + $0x68] sm:$0xf]
    %v1094 = vld [vmem:[%s3 + $0x6c] sm:$0xf]
    %v1095 = vld [vmem:[%s3 + $0x70] sm:$0xf]
    %v1096 = vld [vmem:[%s3 + $0x74] sm:$0xf]
    %v1097 = vld [vmem:[%s3 + $0x78] sm:$0xf]
    %v1098 = vld [vmem:[%s3 + $0x7c] sm:$0xf]
    %v1099 = vld [vmem:[%s4] sm:$0x1]
    %v1101 = vperm.slane %v1099, 0
    %v1135 = vunpack.c.l.b16 %v1067
    %v1136 = vunpack.c.l.b16 %v1068
    %v1137 = vunpack.c.l.b16 %v1069
    %v1138 = vunpack.c.l.b16 %v1070
    %v1139 = vunpack.c.l.b16 %v1071
    %v1140 = vunpack.c.l.b16 %v1072
    %v1141 = vunpack.c.l.b16 %v1073
    %v1142 = vunpack.c.l.b16 %v1074
    %v1143 = vunpack.c.l.b16 %v1075
    %v1144 = vunpack.c.l.b16 %v1076
    %v1145 = vunpack.c.l.b16 %v1077
    %v1146 = vunpack.c.l.b16 %v1078
    %v1147 = vunpack.c.l.b16 %v1079
    %v1148 = vunpack.c.l.b16 %v1080
    %v1149 = vunpack.c.l.b16 %v1081
    %v1150 = vunpack.c.l.b16 %v1082
    %v1151 = vunpack.c.l.b16 %v1083
    %v1152 = vunpack.c.l.b16 %v1084
    %v1153 = vunpack.c.l.b16 %v1085
    %v1154 = vunpack.c.l.b16 %v1086
    %v1155 = vunpack.c.l.b16 %v1087
    %v1156 = vunpack.c.l.b16 %v1088
    %v1157 = vunpack.c.l.b16 %v1089
    %v1158 = vunpack.c.l.b16 %v1090
    %v1159 = vunpack.c.l.b16 %v1091
    %v1160 = vunpack.c.l.b16 %v1092
    %v1161 = vunpack.c.l.b16 %v1093
    %v1162 = vunpack.c.l.b16 %v1094
    %v1163 = vunpack.c.l.b16 %v1095
    %v1164 = vunpack.c.l.b16 %v1096
    %v1165 = vunpack.c.l.b16 %v1097
    %v1166 = vunpack.c.l.b16 %v1098
    %v1167 = vpack.c.b16 %v1136, %v1135
    %v1168 = vpack.c.b16 %v1138, %v1137
    %v1169 = vpack.c.b16 %v1140, %v1139
    %v1170 = vpack.c.b16 %v1142, %v1141
    %v1171 = vpack.c.b16 %v1144, %v1143
    %v1172 = vpack.c.b16 %v1146, %v1145
    %v1173 = vpack.c.b16 %v1148, %v1147
    %v1174 = vpack.c.b16 %v1150, %v1149
    %v1175 = vpack.c.b16 %v1152, %v1151
    %v1176 = vpack.c.b16 %v1154, %v1153
    %v1177 = vpack.c.b16 %v1156, %v1155
    %v1178 = vpack.c.b16 %v1158, %v1157
    %v1179 = vpack.c.b16 %v1160, %v1159
    %v1180 = vpack.c.b16 %v1162, %v1161
    %v1181 = vpack.c.b16 %v1164, %v1163
    %v1182 = vpack.c.b16 %v1166, %v1165
    %1199 = vmatpush.bf16.msra.mxu0 %v1174
    %1200 = vmatpush.bf16.msra.mxu0 %v1173
    %1201 = vmatpush.bf16.msra.mxu0 %v1172
    %1202 = vmatpush.bf16.msra.mxu0 %v1171
    %1203 = vmatpush.bf16.msra.mxu0 %v1170
    %1204 = vmatpush.bf16.msra.mxu0 %v1169
    %1205 = vmatpush.bf16.msra.mxu0 %v1168
    %1206 = vmatpush.bf16.msra.mxu0 %v1167
    %1207 = vmatmul.bf16.gmra.mxu0 %v1065
    %v1208 = vpop.f32.mrf.mxu0
    %v1209 = vadd.f32 %v1101, %v1208
    %v1210 = vpop.f32.mrf.mxu0
    %1211 = vdwg.mxu0
    %1212 = vmatpush.bf16.msra.mxu0 %v1182
    %1213 = vmatpush.bf16.msra.mxu0 %v1181
    %1214 = vmatpush.bf16.msra.mxu0 %v1180
    %1215 = vmatpush.bf16.msra.mxu0 %v1179
    %1216 = vmatpush.bf16.msra.mxu0 %v1178
    %1217 = vmatpush.bf16.msra.mxu0 %v1177
    %1218 = vmatpush.bf16.msra.mxu0 %v1176
    %1219 = vmatpush.bf16.msra.mxu0 %v1175
    %1220 = vmatmul.bf16.gmra.mxu0 %v1066
    %v1221 = vpop.f32.mrf.mxu0
    %v1222 = vadd.f32 %v1209, %v1221
    %v1223 = vpop.f32.mrf.mxu0
    %1224 = vdwg.mxu0
    %v1225 = vmax.f32 %v1222, 0.0
    %v1226 = vpack.c.bf16 %v1225, %v1225
    %v1227 = vld [vmem:[%s5] sm:$0xf]
    %v1228 = vld [vmem:[%s5 + $0x4] sm:$0xf]
    %v1229 = vld [vmem:[%s5 + $0x8] sm:$0xf]
    %v1230 = vld [vmem:[%s5 + $0xc] sm:$0xf]
    %v1231 = vld [vmem:[%s5 + $0x10] sm:$0xf]
    %v1232 = vld [vmem:[%s5 + $0x14] sm:$0xf]
    %v1233 = vld [vmem:[%s5 + $0x18] sm:$0xf]
    %v1234 = vld [vmem:[%s5 + $0x1c] sm:$0xf]
    %v1235 = vld [vmem:[%s6] sm:$0x1]
    %v1237 = vperm.slane %v1235, 0
    %v1247 = vunpack.c.l.b16 %v1227
    %v1248 = vunpack.c.l.b16 %v1228
    %v1249 = vunpack.c.l.b16 %v1229
    %v1250 = vunpack.c.l.b16 %v1230
    %v1251 = vunpack.c.l.b16 %v1231
    %v1252 = vunpack.c.l.b16 %v1232
    %v1253 = vunpack.c.l.b16 %v1233
    %v1254 = vunpack.c.l.b16 %v1234
    %v1255 = vpack.c.b16 %v1248, %v1247
    %v1256 = vpack.c.b16 %v1250, %v1249
    %v1257 = vpack.c.b16 %v1252, %v1251
    %v1258 = vpack.c.b16 %v1254, %v1253
    %vm1263 = vcmask 523264
    %v1265 = vsel %vm1263, %v1226, 0
    %1267 = vmatpush.bf16.msra.mxu0 0
    %1268 = vmatpush.bf16.msra.mxu0 0
    %1269 = vmatpush.bf16.msra.mxu0 0
    %1270 = vmatpush.bf16.msra.mxu0 0
    %1271 = vmatpush.bf16.msra.mxu0 %v1258
    %1272 = vmatpush.bf16.msra.mxu0 %v1257
    %1273 = vmatpush.bf16.msra.mxu0 %v1256
    %1274 = vmatpush.bf16.msra.mxu0 %v1255
    %1275 = vmatmul.bf16.gmra.mxu0 %v1265
    %v1276 = vpop.f32.mrf.mxu0
    %v1277 = vadd.f32 %v1237, %v1276
    %v1278 = vpop.f32.mrf.mxu0
    %1279 = vdwg.mxu0
    %v1280 = vmax.f32 %v1277, 0.0
    %v1281 = vpack.c.bf16 %v1280, %v1280
    %v1282 = vld [vmem:[%s7] sm:$0xf]
    %v1283 = vld [vmem:[%s7 + $0x4] sm:$0xf]
    %v1284 = vld [vmem:[%s7 + $0x8] sm:$0xf]
    %v1285 = vld [vmem:[%s7 + $0xc] sm:$0xf]
    %v1286 = vld [vmem:[%s8] sm:$0x1]
    %v1288 = vperm.slane %v1286, 0
    %v1294 = vunpack.c.l.b16 %v1282
    %v1295 = vunpack.c.l.b16 %v1283
    %v1296 = vunpack.c.l.b16 %v1284
    %v1297 = vunpack.c.l.b16 %v1285
    %v1298 = vpack.c.b16 %v1295, %v1294
    %v1299 = vpack.c.b16 %v1297, %v1296
    %vm1302 = vcmask 261120
    %v1304 = vsel %vm1302, %v1281, 0
    %1306 = vmatpush.bf16.msra.mxu0 0
    %1307 = vmatpush.bf16.msra.mxu0 0
    %1308 = vmatpush.bf16.msra.mxu0 0
    %1309 = vmatpush.bf16.msra.mxu0 0
    %1310 = vmatpush.bf16.msra.mxu0 0
    %1311 = vmatpush.bf16.msra.mxu0 0
    %1312 = vmatpush.bf16.msra.mxu0 %v1299
    %1313 = vmatpush.bf16.msra.mxu0 %v1298
    %1314 = vmatmul.bf16.gmra.mxu0 %v1304
    %v1315 = vpop.f32.mrf.mxu0
    %v1316 = vadd.f32 %v1288, %v1315
    %v1317 = vpop.f32.mrf.mxu0
    %1318 = vdwg.mxu0
    %vm1319 = vcmask 15360
    %1320 = vst.msk [vmem:[%s9] sm:$0xff] %vm1319, %v1316
    // Predicated region
    $region42: #{tpu_custom_call.1} parent=1 // pred_check
      _
    $region43: #{tpu_custom_call.1} parent=1 // pred_check_branch
      %1322 = sbr.rel (0) target = $region45
    $region44: #{tpu_custom_call.1} parent=1 // pred_region
      _
    $region45: #{tpu_custom_call.1} parent=1 // pred_fallthru
      _
    // Predicated region
    $region46: #{tpu_custom_call.1} parent=1 // pred_check
      _
    $region47: #{tpu_custom_call.1} parent=1 // pred_check_branch
      %1324 = sbr.rel (0) target = $region49
    $region48: #{tpu_custom_call.1} parent=1 // pred_region
      _
    $region49: #{tpu_custom_call.1} parent=1 // pred_fallthru
      _
    %1325 = vsyncpa [#allocation3], 1

</llo_original>
